<compile_context>
chip_gen: v5e
topology: v5e:2x2
jax: 0.10.0
libtpu: 0.0.40
codegen_flags: <defaults>
</compile_context>

<pallas_src>
import functools

import jax
import jax.numpy as jnp
from jax.experimental import pallas as pl
from jax.experimental.pallas import tpu as pltpu
from jax.scipy.stats import beta as beta_dist

LANE = 128


def _round_up(x, m):
    return ((x + m - 1) // m) * m


def _softplus(x):
    # numerically stable softplus on the VPU/EUP (f32).  (log1p(exp(-|x|)) would be
    # marginally more accurate for |x| >> 1; difference is <1e-7 on results >= 1,
    # far below the bf16 matmul tolerance, so the known-good formulation is kept.)
    return jnp.maximum(x, 0.0) + jnp.log(1.0 + jnp.exp(-jnp.abs(x)))


def _is_v5e():
    try:
        kind = jax.devices()[0].device_kind.lower()
    except Exception:
        return False
    return ("v5 lite" in kind) or ("v5e" in kind) or ("v5litepod" in kind)


def _default_tile_b(B):
    rows = _round_up(max(B, 8), 8)
    if rows <= 8:
        return 8
    # >=2 tiles so the "parallel" batch axis can shard across both v7x TCs;
    # cap at 1024 rows/tile (VMEM stays far under the scoped limit).
    half = _round_up((rows + 1) // 2, 8)
    return min(1024, half)


def a2c_net_kernel(x_ref, w1_ref, b1_ref, w2_ref, b2_ref, wh_ref, bh_ref,
                   out_ref, *, value_col, hidden_p, split_l2):
    """One batch tile: fused policy(alpha,beta) + critic(q1).

    Output layout per row (128 lanes): [0:A)=alpha, [A:2A)=beta, col 2A = q1,
    remaining lanes are don't-care padding (sliced off in the wrapper).
    """
    H = hidden_p
    xb = x_ref[...].astype(jnp.bfloat16)

    # ---- layer 1: policy + critic trunks share one 2H-wide MXU pass ----
    h1 = jnp.maximum(
        jnp.dot(xb, w1_ref[...], preferred_element_type=jnp.float32)
        + b1_ref[...], 0.0)

    if split_l2:
        # v5e path: 128-wide weights are MXU-native; skip the block-diag zeros.
        hp = jnp.maximum(
            jnp.dot(h1[:, :H].astype(jnp.bfloat16),
                    w2_ref[pl.ds(0, H), pl.ds(0, H)],
                    preferred_element_type=jnp.float32)
            + b2_ref[:, pl.ds(0, H)], 0.0)
        hc = jnp.maximum(
            jnp.dot(h1[:, H:].astype(jnp.bfloat16),
                    w2_ref[pl.ds(H, H), pl.ds(H, H)],
                    preferred_element_type=jnp.float32)
            + b2_ref[:, pl.ds(H, H)], 0.0)
        head = (jnp.dot(hp.astype(jnp.bfloat16), wh_ref[pl.ds(0, H), :],
                        preferred_element_type=jnp.float32)
                + jnp.dot(hc.astype(jnp.bfloat16), wh_ref[pl.ds(H, H), :],
                          preferred_element_type=jnp.float32)
                + bh_ref[...])
    else:
        # v6e / v7x path: full 256-wide layer-2 + fused 256-wide head.
        h2 = jnp.maximum(
            jnp.dot(h1.astype(jnp.bfloat16), w2_ref[...],
                    preferred_element_type=jnp.float32) + b2_ref[...], 0.0)
        head = jnp.dot(h2.astype(jnp.bfloat16), wh_ref[...],
                       preferred_element_type=jnp.float32) + bh_ref[...]

    # alpha/beta lanes get softplus+1; the q1 lane stays linear.
    act = _softplus(head) + 1.0
    lane = jax.lax.broadcasted_iota(jnp.int32, head.shape, 1)
    out_ref[...] = jnp.where(lane == value_col, head, act)


def a2c_net_forward(state, packed, action_size, *, tile_b=None, split_l2=None):
    """state: [B, state_dim] f32. Returns (alpha [B,A], beta [B,A], q1 [B,1])."""
    B, state_dim = state.shape
    two_hp = packed["w1"].shape[1]
    Hp = two_hp // 2
    assert packed["w1"].shape[0] == state_dim
    assert 2 * action_size + 1 <= LANE, (
        "packed head layout requires 2*action_size + 1 <= 128 lanes")
    value_col = 2 * action_size

    if split_l2 is None:
        split_l2 = _is_v5e()
    if tile_b is None:
        tile_b = _default_tile_b(B)

    padded_b = _round_up(B, tile_b)
    x = state
    if padded_b != B:
        x = jnp.zeros((padded_b, state_dim), state.dtype).at[:B].set(state)

    grid = (padded_b // tile_b,)
    row_spec = pl.BlockSpec((tile_b, state_dim), lambda i: (i, 0))
    out_spec = pl.BlockSpec((tile_b, LANE), lambda i: (i, 0))

    def const_spec(shape):
        # constant index_map -> weights stay VMEM-resident across grid steps
        # (single-buffering them via pl.Buffered(1) is a marginal further win).
        return pl.BlockSpec(shape, lambda i: (0, 0))

    out = pl.pallas_call(
        functools.partial(a2c_net_kernel, value_col=value_col,
                          hidden_p=Hp, split_l2=split_l2),
        out_shape=jax.ShapeDtypeStruct((padded_b, LANE), jnp.float32),
        grid=grid,
        in_specs=[row_spec,
                  const_spec((state_dim, two_hp)), const_spec((1, two_hp)),
                  const_spec((two_hp, two_hp)), const_spec((1, two_hp)),
                  const_spec((two_hp, LANE)), const_spec((1, LANE))],
        out_specs=out_spec,
        compiler_params=pltpu.CompilerParams(
            dimension_semantics=("parallel",)),
    )(x, packed["w1"], packed["b1"], packed["w2"], packed["b2"],
      packed["wh"], packed["bh"])

    alpha = out[:B, :action_size]
    beta = out[:B, action_size:2 * action_size]
    value = out[:B, value_col:value_col + 1]
    return alpha, beta, value


def a2c_agent_forward(key, state, packed, action_size,
                      a_min=-1.0, a_max=1.0, tile_b=None):
    """Mirrors A2CAgent.forward (continuous / beta): (action, logprob, probs, value)."""
    # TODO(synk): stochastic Beta sampling / log-prob has no Pallas equivalent;
    # it stays in plain JAX on top of the fused-kernel outputs.
    alpha, beta, value = a2c_net_forward(state, packed, action_size, tile_b=tile_b)
    sample = jax.random.beta(key, alpha, beta)
    sample = jnp.clip(sample, 1e-6, 1.0 - 1e-6)
    action = a_min + (a_max - a_min) * sample
    logprob = jnp.sum(beta_dist.logpdf(sample, alpha, beta), axis=1)
    probs = jnp.concatenate([alpha, beta], axis=1)
    return action, logprob, probs, value


def init_params(key, state_dim, hidden, action_size):
    """PyTorch-default (uniform +/- 1/sqrt(fan_in)) init.

    Returns (raw, packed): raw = unpadded f32 [in,out] weights for the pure-JAX
    reference; packed = fused / lane-padded bf16 weights (f32 biases) consumed
    by the kernel.
    """
    assert 2 * action_size + 1 <= LANE, (
        "packed head layout requires 2*action_size + 1 <= 128 lanes")
    ks = jax.random.split(key, 14)

    def lin(kw, kb, fan_in, fan_out):
        bound = 1.0 / jnp.sqrt(jnp.float32(fan_in))
        w = jax.random.uniform(kw, (fan_in, fan_out), jnp.float32, -bound, bound)
        b = jax.random.uniform(kb, (1, fan_out), jnp.float32, -bound, bound)
        return w, b

    p_w1, p_b1 = lin(ks[0], ks[1], state_dim, hidden)       # policy embedding l1
    p_w2, p_b2 = lin(ks[2], ks[3], hidden, hidden)           # policy embedding l2
    p_wa, p_ba = lin(ks[4], ks[5], hidden, action_size)      # alpha head
    p_wb, p_bb = lin(ks[6], ks[7], hidden, action_size)      # beta head
    c_w1, c_b1 = lin(ks[8], ks[9], state_dim, hidden)        # critic embedding l1
    c_w2, c_b2 = lin(ks[10], ks[11], hidden, hidden)         # critic embedding l2
    c_w3, c_b3 = lin(ks[12], ks[13], hidden, 1)              # q1 head

    raw = dict(p_w1=p_w1, p_b1=p_b1, p_w2=p_w2, p_b2=p_b2,
               p_wa=p_wa, p_ba=p_ba, p_wb=p_wb, p_bb=p_bb,
               c_w1=c_w1, c_b1=c_b1, c_w2=c_w2, c_b2=c_b2,
               c_w3=c_w3, c_b3=c_b3)

    Hp = _round_up(hidden, LANE)
    A = action_size
    value_col = 2 * A

    # layer-1: [wp1 | wc1], hidden dim zero-padded to Hp per trunk
    w1 = jnp.zeros((state_dim, 2 * Hp), jnp.float32)
    w1 = w1.at[:, :hidden].set(p_w1).at[:, Hp:Hp + hidden].set(c_w1)
    b1 = jnp.zeros((1, 2 * Hp), jnp.float32)
    b1 = b1.at[:, :hidden].set(p_b1).at[:, Hp:Hp + hidden].set(c_b1)

    # layer-2: block-diagonal (policy block top-left, critic block bottom-right)
    w2 = jnp.zeros((2 * Hp, 2 * Hp), jnp.float32)
    w2 = w2.at[:hidden, :hidden].set(p_w2)
    w2 = w2.at[Hp:Hp + hidden, Hp:Hp + hidden].set(c_w2)
    b2 = jnp.zeros((1, 2 * Hp), jnp.float32)
    b2 = b2.at[:, :hidden].set(p_b2).at[:, Hp:Hp + hidden].set(c_b2)

    # fused head: rows [0:Hp) -> alpha/beta columns, rows [Hp:2Hp) -> q1 column;
    # q1 bias folded into the head bias.
    wh = jnp.zeros((2 * Hp, LANE), jnp.float32)
    wh = wh.at[:hidden, :A].set(p_wa).at[:hidden, A:2 * A].set(p_wb)
    wh = wh.at[Hp:Hp + hidden, value_col:value_col + 1].set(c_w3)
    bh = jnp.zeros((1, LANE), jnp.float32)
    bh = bh.at[:, :A].set(p_ba).at[:, A:2 * A].set(p_bb)
    bh = bh.at[:, value_col:value_col + 1].set(c_b3)

    packed = dict(
        w1=w1.astype(jnp.bfloat16), b1=b1,
        w2=w2.astype(jnp.bfloat16), b2=b2,
        wh=wh.astype(jnp.bfloat16), bh=bh,
    )
    return raw, packed


def a2c_net_reference(state, raw):
    def trunk(x, w1, b1, w2, b2):
        h = jnp.maximum(x @ w1 + b1, 0.0)
        return jnp.maximum(h @ w2 + b2, 0.0)

    hp = trunk(state, raw["p_w1"], raw["p_b1"], raw["p_w2"], raw["p_b2"])
    alpha = jax.nn.softplus(hp @ raw["p_wa"] + raw["p_ba"]) + 1.0
    beta = jax.nn.softplus(hp @ raw["p_wb"] + raw["p_bb"]) + 1.0
    hc = trunk(state, raw["c_w1"], raw["c_b1"], raw["c_w2"], raw["c_b2"])
    value = hc @ raw["c_w3"] + raw["c_b3"]
    return alpha, beta, value


if __name__ == "__main__":
    key = jax.random.PRNGKey(0)
    k_state, k_params, k_sample = jax.random.split(key, 3)

    B, state_dim, hidden, action_size = 8, 16, 32, 2
    state = jax.random.normal(k_state, (B, state_dim), jnp.float32)
    raw, packed = init_params(k_params, state_dim, hidden, action_size)

    alpha, beta, value = a2c_net_forward(state, packed, action_size)
    jax.block_until_ready((alpha, beta, value))

    ra, rb, rv = a2c_net_reference(state, raw)
    assert alpha.shape == (B, action_size), alpha.shape
    assert beta.shape == (B, action_size), beta.shape
    assert value.shape == (B, 1), value.shape
    tol = dict(atol=3e-2, rtol=3e-2)  # bf16 MXU trunks vs f32 reference
    assert jnp.allclose(alpha, ra, **tol), "alpha mismatch vs reference"
    assert jnp.allclose(beta, rb, **tol), "beta mismatch vs reference"
    assert jnp.allclose(value, rv, **tol), "value mismatch vs reference"

    # exercise the non-default (v5e / split layer-2) code path once too
    alpha2, beta2, value2 = a2c_net_forward(state, packed, action_size,
                                            split_l2=True)
    jax.block_until_ready((alpha2, beta2, value2))
    assert jnp.allclose(alpha2, ra, **tol)
    assert jnp.allclose(beta2, rb, **tol)
    assert jnp.allclose(value2, rv, **tol)

    action, logprob, probs, v = a2c_agent_forward(k_sample, state, packed, action_size)
    jax.block_until_ready((action, logprob, probs, v))
    assert action.shape == (B, action_size)
    assert logprob.shape == (B,)
    assert probs.shape == (B, 2 * action_size)

    print("KERNEL_OK")
</pallas_src>

<mosaic_0001>
module attributes {stable_mosaic.version = 11 : i64} {
  func.func @a2c_net_kernel(%arg0: i32, %arg1: memref<8x16xf32, #tpu.memory_space<vmem>>, %arg2: memref<16x256xbf16, #tpu.memory_space<vmem>>, %arg3: memref<1x256xf32, #tpu.memory_space<vmem>>, %arg4: memref<256x256xbf16, #tpu.memory_space<vmem>>, %arg5: memref<1x256xf32, #tpu.memory_space<vmem>>, %arg6: memref<256x128xbf16, #tpu.memory_space<vmem>>, %arg7: memref<1x128xf32, #tpu.memory_space<vmem>>, %arg8: memref<8x128xf32, #tpu.memory_space<vmem>>) attributes {dimension_semantics = [#tpu.dimension_semantics<parallel>], iteration_bounds = array<i64: 1>, scalar_prefetch = 0 : i64, scratch_operands = 0 : i64, tpu.core_type = #tpu.core_type<tc>, window_params = [{transform_indices = @transform_0, window_bounds = array<i64: 8, 16>}, {pipeline_mode = #tpu.pipeline_mode<synchronous>, transform_indices = @transform_1, window_bounds = array<i64: 16, 256>}, {pipeline_mode = #tpu.pipeline_mode<synchronous>, transform_indices = @transform_2, window_bounds = array<i64: 1, 256>}, {pipeline_mode = #tpu.pipeline_mode<synchronous>, transform_indices = @transform_3, window_bounds = array<i64: 256, 256>}, {pipeline_mode = #tpu.pipeline_mode<synchronous>, transform_indices = @transform_4, window_bounds = array<i64: 1, 256>}, {pipeline_mode = #tpu.pipeline_mode<synchronous>, transform_indices = @transform_5, window_bounds = array<i64: 256, 128>}, {pipeline_mode = #tpu.pipeline_mode<synchronous>, transform_indices = @transform_6, window_bounds = array<i64: 1, 128>}, {transform_indices = @transform_7, window_bounds = array<i64: 8, 128>}]} {
    %c0 = arith.constant 0 : index
    %c0_0 = arith.constant 0 : index
    %0 = vector.load %arg1[%c0, %c0_0] : memref<8x16xf32, #tpu.memory_space<vmem>>, vector<8x16xf32>
    %1 = arith.truncf %0 : vector<8x16xf32> to vector<8x16xbf16>
    %c0_1 = arith.constant 0 : index
    %c0_2 = arith.constant 0 : index
    %2 = vector.load %arg2[%c0_1, %c0_2] : memref<16x256xbf16, #tpu.memory_space<vmem>>, vector<16x256xbf16>
    %cst = arith.constant dense<0.000000e+00> : vector<8x256xf32>
    %3 = tpu.matmul %1, %2, %cst {dimension_numbers = #tpu.dot_dimension_numbers<[1], [0], [0], [1], [0, 0, 1, 1], [], []>} : vector<8x16xbf16>, vector<16x256xbf16>, vector<8x256xf32> -> vector<8x256xf32>
    %c0_3 = arith.constant 0 : index
    %c0_4 = arith.constant 0 : index
    %4 = vector.load %arg3[%c0_3, %c0_4] : memref<1x256xf32, #tpu.memory_space<vmem>>, vector<1x256xf32>
    %5 = vector.broadcast %4 : vector<1x256xf32> to vector<8x256xf32>
    %6 = arith.addf %3, %5 : vector<8x256xf32>
    %cst_5 = arith.constant 0.000000e+00 : f32
    %7 = vector.broadcast %cst_5 : f32 to vector<8x256xf32>
    %8 = arith.maximumf %6, %7 : vector<8x256xf32>
    %9 = arith.truncf %8 : vector<8x256xf32> to vector<8x256xbf16>
    %c0_6 = arith.constant 0 : index
    %c0_7 = arith.constant 0 : index
    %10 = vector.load %arg4[%c0_6, %c0_7] : memref<256x256xbf16, #tpu.memory_space<vmem>>, vector<256x256xbf16>
    %cst_8 = arith.constant dense<0.000000e+00> : vector<8x256xf32>
    %11 = tpu.matmul %9, %10, %cst_8 {dimension_numbers = #tpu.dot_dimension_numbers<[1], [0], [0], [1], [0, 0, 1, 1], [], []>} : vector<8x256xbf16>, vector<256x256xbf16>, vector<8x256xf32> -> vector<8x256xf32>
    %c0_9 = arith.constant 0 : index
    %c0_10 = arith.constant 0 : index
    %12 = vector.load %arg5[%c0_9, %c0_10] : memref<1x256xf32, #tpu.memory_space<vmem>>, vector<1x256xf32>
    %13 = vector.broadcast %12 : vector<1x256xf32> to vector<8x256xf32>
    %14 = arith.addf %11, %13 : vector<8x256xf32>
    %cst_11 = arith.constant 0.000000e+00 : f32
    %15 = vector.broadcast %cst_11 : f32 to vector<8x256xf32>
    %16 = arith.maximumf %14, %15 : vector<8x256xf32>
    %17 = arith.truncf %16 : vector<8x256xf32> to vector<8x256xbf16>
    %c0_12 = arith.constant 0 : index
    %c0_13 = arith.constant 0 : index
    %18 = vector.load %arg6[%c0_12, %c0_13] : memref<256x128xbf16, #tpu.memory_space<vmem>>, vector<256x128xbf16>
    %cst_14 = arith.constant dense<0.000000e+00> : vector<8x128xf32>
    %19 = tpu.matmul %17, %18, %cst_14 {dimension_numbers = #tpu.dot_dimension_numbers<[1], [0], [0], [1], [0, 0, 1, 1], [], []>} : vector<8x256xbf16>, vector<256x128xbf16>, vector<8x128xf32> -> vector<8x128xf32>
    %c0_15 = arith.constant 0 : index
    %c0_16 = arith.constant 0 : index
    %20 = vector.load %arg7[%c0_15, %c0_16] : memref<1x128xf32, #tpu.memory_space<vmem>>, vector<1x128xf32>
    %21 = vector.broadcast %20 : vector<1x128xf32> to vector<8x128xf32>
    %22 = arith.addf %19, %21 : vector<8x128xf32>
    %cst_17 = arith.constant 0.000000e+00 : f32
    %23 = vector.broadcast %cst_17 : f32 to vector<8x128xf32>
    %24 = arith.maximumf %22, %23 : vector<8x128xf32>
    %25 = math.absf %22 : vector<8x128xf32>
    %cst_18 = arith.constant 0.000000e+00 : f32
    %26 = vector.broadcast %cst_18 : f32 to vector<8x128xf32>
    %27 = arith.subf %26, %25 : vector<8x128xf32>
    %28 = math.exp %27 : vector<8x128xf32>
    %cst_19 = arith.constant 1.000000e+00 : f32
    %29 = vector.broadcast %cst_19 : f32 to vector<8x128xf32>
    %30 = arith.addf %29, %28 : vector<8x128xf32>
    %31 = math.log %30 : vector<8x128xf32>
    %32 = arith.addf %24, %31 : vector<8x128xf32>
    %cst_20 = arith.constant 1.000000e+00 : f32
    %33 = vector.broadcast %cst_20 : f32 to vector<8x128xf32>
    %34 = arith.addf %32, %33 : vector<8x128xf32>
    %35 = tpu.iota {dimensions = array<i32: 1>} : vector<8x128xi32>
    %c4_i32 = arith.constant 4 : i32
    %36 = vector.broadcast %c4_i32 : i32 to vector<8x128xi32>
    %37 = arith.cmpi eq, %35, %36 : vector<8x128xi32>
    %38 = arith.select %37, %22, %34 : vector<8x128xi1>, vector<8x128xf32>
    %c0_21 = arith.constant 0 : index
    %c0_22 = arith.constant 0 : index
    %39 = vector.load %arg8[%c0_21, %c0_22] : memref<8x128xf32, #tpu.memory_space<vmem>>, vector<8x128xf32>
    tpu.vector_store %arg8[%c0_21, %c0_22], %38 {strides = array<i32>} : memref<8x128xf32, #tpu.memory_space<vmem>>, vector<8x128xf32>,
    return
  }
  func.func @transform_0(%arg0: i32) -> (i32, i32) {
    %c0_i32 = arith.constant 0 : i32
    %c0_i32_0 = arith.constant 0 : i32
    return %arg0, %c0_i32 : i32, i32
  }
  func.func @transform_1(%arg0: i32) -> (i32, i32) {
    %c0_i32 = arith.constant 0 : i32
    %c0_i32_0 = arith.constant 0 : i32
    %c0_i32_1 = arith.constant 0 : i32
    return %c0_i32, %c0_i32_0 : i32, i32
  }
  func.func @transform_2(%arg0: i32) -> (i32, i32) {
    %c0_i32 = arith.constant 0 : i32
    %c0_i32_0 = arith.constant 0 : i32
    %c0_i32_1 = arith.constant 0 : i32
    return %c0_i32, %c0_i32_0 : i32, i32
  }
  func.func @transform_3(%arg0: i32) -> (i32, i32) {
    %c0_i32 = arith.constant 0 : i32
    %c0_i32_0 = arith.constant 0 : i32
    %c0_i32_1 = arith.constant 0 : i32
    return %c0_i32, %c0_i32_0 : i32, i32
  }
  func.func @transform_4(%arg0: i32) -> (i32, i32) {
    %c0_i32 = arith.constant 0 : i32
    %c0_i32_0 = arith.constant 0 : i32
    %c0_i32_1 = arith.constant 0 : i32
    return %c0_i32, %c0_i32_0 : i32, i32
  }
  func.func @transform_5(%arg0: i32) -> (i32, i32) {
    %c0_i32 = arith.constant 0 : i32
    %c0_i32_0 = arith.constant 0 : i32
    %c0_i32_1 = arith.constant 0 : i32
    return %c0_i32, %c0_i32_0 : i32, i32
  }
  func.func @transform_6(%arg0: i32) -> (i32, i32) {
    %c0_i32 = arith.constant 0 : i32
    %c0_i32_0 = arith.constant 0 : i32
    %c0_i32_1 = arith.constant 0 : i32
    return %c0_i32, %c0_i32_0 : i32, i32
  }
  func.func @transform_7(%arg0: i32) -> (i32, i32) {
    %c0_i32 = arith.constant 0 : i32
    %c0_i32_0 = arith.constant 0 : i32
    return %arg0, %c0_i32 : i32, i32
  }
}

</mosaic_0001>

<llo_original>
// kernel: tpu_custom_call.1
$region0: #{tpu_custom_call.1}
  #allocation0 [shape = 'u32[]', space=smem, size = 0x4, offset = 0x4, fixed_abs, tag = 'smem constant byte address 0x4 - core index']
  #allocation1 [shape = 'u32[72,128]{1,0:T(1,128)}', space=vmem, size = 0x9000, scoped, tag = 'internal scratch']
  %s0 = inlined_call_operand.hbm [shape: f32[8,16], index: 0, kind: input, shape index: {}]
  %s1 = inlined_call_operand.hbm [shape: bf16[16,256], index: 1, kind: input, shape index: {}]
  %s2 = inlined_call_operand.hbm [shape: f32[1,256], index: 2, kind: input, shape index: {}]
  %s3 = inlined_call_operand.hbm [shape: bf16[256,256], index: 3, kind: input, shape index: {}]
  %s4 = inlined_call_operand.vmem [shape: f32[1,256], index: 4, kind: input, shape index: {}]
  %s5 = inlined_call_operand.hbm [shape: bf16[256,128], index: 5, kind: input, shape index: {}]
  %s6 = inlined_call_operand.vmem [shape: f32[1,128], index: 6, kind: input, shape index: {}]
  %s7 = inlined_call_operand.hbm [shape: f32[8,128], index: 7, kind: output, shape index: {}]
  %s8 = sld [smem:[#allocation0]]
  $region58: #{tpu_custom_call.1} parent=0
    _
  %s10 = ssub.s32 1, %s8
  %s11 = scalar_select 0, %s10, %s8
  $region1: #{tpu_custom_call.1} parent=0
    #allocation2 [shape = 'u8[4096]{0}', space=vmem, size = 0x1000, scoped, tag = 'input window, operand 0, single buffered']
    #allocation3 [shape = 's32[1]{0}', space=sflag, size = 0x4, scoped, tag = 'scoped memory for tpu_custom_call.1']
    #allocation4 [shape = 's32[1]{0}', space=sflag, size = 0x4, scoped, tag = 'scoped memory for tpu_custom_call.1']
    #allocation5 [shape = 'u8[8192]{0}', space=vmem, size = 0x2000, scoped, tag = 'input window, operand 1, single buffered']
    #allocation6 [shape = 's32[1]{0}', space=sflag, size = 0x4, scoped, tag = 'scoped memory for tpu_custom_call.1']
    #allocation7 [shape = 'u8[1024]{0}', space=vmem, size = 0x400, scoped, tag = 'input window, operand 2, single buffered']
    #allocation8 [shape = 'u8[131072]{0}', space=vmem, size = 0x20000, scoped, tag = 'input window, operand 3, single buffered']
    #allocation9 [shape = 's32[1]{0}', space=sflag, size = 0x4, scoped, tag = 'scoped memory for tpu_custom_call.1']
    #allocation10 [shape = 'u8[65536]{0}', space=vmem, size = 0x10000, scoped, tag = 'input window, operand 5, single buffered']
    #allocation11 [shape = 'u8[4096]{0}', space=vmem, size = 0x1000, scoped, tag = 'output window, operand 0, single buffered']
    %12 = vsyncpa [#allocation3], 0
    %13 = vsyncpa [#allocation6], 0
    %14 = vsyncpa [#allocation9], 0
    %15 = vsyncpa [#allocation4], 0
    // Predicated region
    $region2: #{tpu_custom_call.1} parent=1 // pred_check
      _
    $region3: #{tpu_custom_call.1} parent=1 // pred_check_branch
      %17 = sbr.rel (0) target = $region5
    $region4: #{tpu_custom_call.1} parent=1 // pred_region
      %19 = vsyncadd [#allocation3], 0
      %s21 = sshll.u32 %s0, 4
      %s22 = int_to_ptr.hbm [resolvable:$true] %s21
      %s23 = sshll.u32 [#allocation2], 4
      %s24 = int_to_ptr.vmem [resolvable:$true] %s23
      %26 = dma.hbm_to_vmem [thread:$0]  %s22, 128, %s24, [#allocation3]
    $region5: #{tpu_custom_call.1} parent=1 // pred_fallthru
      _
    // Predicated region
    $region6: #{tpu_custom_call.1} parent=1 // pred_check
      _
    $region7: #{tpu_custom_call.1} parent=1 // pred_check_branch
      %28 = sbr.rel (0) target = $region9
    $region8: #{tpu_custom_call.1} parent=1 // pred_region
      %30 = vsyncadd [#allocation6], 0
      %s31 = sshll.u32 %s1, 4
      %s32 = int_to_ptr.hbm [resolvable:$true] %s31
      %s33 = sshll.u32 [#allocation5], 4
      %s34 = int_to_ptr.vmem [resolvable:$true] %s33
      %39 = dma.hbm_to_vmem [thread:$0]  %s32, 256, %s34, [#allocation6], 128, 128, 8
    $region9: #{tpu_custom_call.1} parent=1 // pred_fallthru
      _
    // Predicated region
    $region10: #{tpu_custom_call.1} parent=1 // pred_check
      _
    $region11: #{tpu_custom_call.1} parent=1 // pred_check_branch
      %41 = sbr.rel (0) target = $region13
    $region12: #{tpu_custom_call.1} parent=1 // pred_region
      %43 = vsyncadd [#allocation6], 0
      %s45 = sshll.u32 %s2, 4
      %s46 = int_to_ptr.hbm [resolvable:$true] %s45
      %s47 = sshll.u32 [#allocation7], 4
      %s48 = int_to_ptr.vmem [resolvable:$true] %s47
      %50 = dma.hbm_to_vmem [thread:$0]  %s46, 32, %s48, [#allocation6]
    $region13: #{tpu_custom_call.1} parent=1 // pred_fallthru
      _
    // Predicated region
    $region14: #{tpu_custom_call.1} parent=1 // pred_check
      _
    $region15: #{tpu_custom_call.1} parent=1 // pred_check_branch
      %52 = sbr.rel (0) target = $region17
    $region16: #{tpu_custom_call.1} parent=1 // pred_region
      %54 = vsyncadd [#allocation9], 0
      %s55 = sshll.u32 %s3, 4
      %s56 = int_to_ptr.hbm [resolvable:$true] %s55
      %s57 = sshll.u32 [#allocation8], 4
      %s58 = int_to_ptr.vmem [resolvable:$true] %s57
      %63 = dma.hbm_to_vmem [thread:$0]  %s56, 4096, %s58, [#allocation9], 128, 128, 8
    $region17: #{tpu_custom_call.1} parent=1 // pred_fallthru
      _
    // Predicated region
    $region18: #{tpu_custom_call.1} parent=1 // pred_check
      _
    $region19: #{tpu_custom_call.1} parent=1 // pred_check_branch
      %65 = sbr.rel (0) target = $region21
    $region20: #{tpu_custom_call.1} parent=1 // pred_region
      _
    $region21: #{tpu_custom_call.1} parent=1 // pred_fallthru
      _
    // Predicated region
    $region22: #{tpu_custom_call.1} parent=1 // pred_check
      _
    $region23: #{tpu_custom_call.1} parent=1 // pred_check_branch
      %67 = sbr.rel (0) target = $region25
    $region24: #{tpu_custom_call.1} parent=1 // pred_region
      %69 = vsyncadd [#allocation9], 0
      %s70 = sshll.u32 %s5, 4
      %s71 = int_to_ptr.hbm [resolvable:$true] %s70
      %s72 = sshll.u32 [#allocation10], 4
      %s73 = int_to_ptr.vmem [resolvable:$true] %s72
      %78 = dma.hbm_to_vmem [thread:$0]  %s71, 2048, %s73, [#allocation9], 64, 64, 4
    $region25: #{tpu_custom_call.1} parent=1 // pred_fallthru
      _
    // Predicated region
    $region26: #{tpu_custom_call.1} parent=1 // pred_check
      _
    $region27: #{tpu_custom_call.1} parent=1 // pred_check_branch
      %80 = sbr.rel (0) target = $region29
    $region28: #{tpu_custom_call.1} parent=1 // pred_region
      _
    $region29: #{tpu_custom_call.1} parent=1 // pred_fallthru
      _
    // Predicated region
    $region30: #{tpu_custom_call.1} parent=1 // pred_check
      _
    $region31: #{tpu_custom_call.1} parent=1 // pred_check_branch
      %82 = sbr.rel (0) target = $region33
    $region32: #{tpu_custom_call.1} parent=1 // pred_region
      %84 = dma.done [#allocation3], 128
    $region33: #{tpu_custom_call.1} parent=1 // pred_fallthru
      _
    // Predicated region
    $region34: #{tpu_custom_call.1} parent=1 // pred_check
      _
    $region35: #{tpu_custom_call.1} parent=1 // pred_check_branch
      %86 = sbr.rel (0) target = $region37
    $region36: #{tpu_custom_call.1} parent=1 // pred_region
      %88 = dma.done [#allocation6], 256
    $region37: #{tpu_custom_call.1} parent=1 // pred_fallthru
      _
    // Predicated region
    $region38: #{tpu_custom_call.1} parent=1 // pred_check
      _
    $region39: #{tpu_custom_call.1} parent=1 // pred_check_branch
      %90 = sbr.rel (0) target = $region41
    $region40: #{tpu_custom_call.1} parent=1 // pred_region
      %92 = dma.done [#allocation6], 32
    $region41: #{tpu_custom_call.1} parent=1 // pred_fallthru
      _
    // Predicated region
    $region42: #{tpu_custom_call.1} parent=1 // pred_check
      _
    $region43: #{tpu_custom_call.1} parent=1 // pred_check_branch
      %94 = sbr.rel (0) target = $region45
    $region44: #{tpu_custom_call.1} parent=1 // pred_region
      %96 = dma.done [#allocation9], 4096
    $region45: #{tpu_custom_call.1} parent=1 // pred_fallthru
      _
    // Predicated region
    $region46: #{tpu_custom_call.1} parent=1 // pred_check
      _
    $region47: #{tpu_custom_call.1} parent=1 // pred_check_branch
      %98 = sbr.rel (0) target = $region49
    $region48: #{tpu_custom_call.1} parent=1 // pred_region
      %100 = dma.done [#allocation9], 2048
    $region49: #{tpu_custom_call.1} parent=1 // pred_fallthru
      _
    %v102 = vld [vmem:[#allocation2] sm:$0xff]
    %v103 = vpack.c.bf16 %v102, %v102
    %v104 = vld [vmem:[#allocation5] sm:$0xff]
    %v105 = vld [vmem:[#allocation5 + $0x8] sm:$0xff]
    %v106 = vld [vmem:[#allocation7] sm:$0x3]
    %v108 = vperm.slane %v106, 0
    %v109 = vperm.slane %v106, 1
    %v114 = vunpack.c.l.b16 %v104
    %v115 = vunpack.c.h.b16 %v104
    %v116 = vunpack.c.l.b16 %v105
    %v117 = vunpack.c.h.b16 %v105
    %v118 = vpack.c.b16 %v116, %v114
    %v119 = vpack.c.b16 %v117, %v115
    %vm122 = vcmask 130048
    %v124 = vsel %vm122, %v103, 0
    %126 = vmatpush.bf16.msra.mxu0 0
    %127 = vmatpush.bf16.msra.mxu0 0
    %128 = vmatpush.bf16.msra.mxu0 0
    %129 = vmatpush.bf16.msra.mxu0 0
    %130 = vmatpush.bf16.msra.mxu0 0
    %131 = vmatpush.bf16.msra.mxu0 0
    %132 = vmatpush.bf16.msra.mxu0 0
    %133 = vmatpush.bf16.msra.mxu0 %v118
    %134 = vmatmul.bf16.gmra.mxu0 %v124
    %v135 = vpop.f32.mrf.mxu0
    %v136 = vadd.f32 %v108, %v135
    %v137 = vpop.f32.mrf.mxu0
    %138 = vdwg.mxu0
    %139 = vmatpush.bf16.msra.mxu0 0
    %140 = vmatpush.bf16.msra.mxu0 0
    %141 = vmatpush.bf16.msra.mxu0 0
    %142 = vmatpush.bf16.msra.mxu0 0
    %143 = vmatpush.bf16.msra.mxu0 0
    %144 = vmatpush.bf16.msra.mxu0 0
    %145 = vmatpush.bf16.msra.mxu0 0
    %146 = vmatpush.bf16.msra.mxu0 %v119
    %147 = vmatmul.bf16.gmra.mxu0 %v124
    %v148 = vpop.f32.mrf.mxu0
    %v149 = vadd.f32 %v109, %v148
    %v150 = vpop.f32.mrf.mxu0
    %151 = vdwg.mxu0
    %v152 = vmax.f32 %v136, 0.0
    %v153 = vmax.f32 %v149, 0.0
    %v154 = vpack.c.bf16 %v152, %v152
    %v155 = vpack.c.bf16 %v153, %v153
    %v156 = vld [vmem:[#allocation8] sm:$0xff]
    %v157 = vld [vmem:[#allocation8 + $0x8] sm:$0xff]
    %v158 = vld [vmem:[#allocation8 + $0x10] sm:$0xff]
    %v159 = vld [vmem:[#allocation8 + $0x18] sm:$0xff]
    %v160 = vld [vmem:[#allocation8 + $0x20] sm:$0xff]
    %v161 = vld [vmem:[#allocation8 + $0x28] sm:$0xff]
    %v162 = vld [vmem:[#allocation8 + $0x30] sm:$0xff]
    %v163 = vld [vmem:[#allocation8 + $0x38] sm:$0xff]
    %v164 = vld [vmem:[#allocation8 + $0x40] sm:$0xff]
    %v165 = vld [vmem:[#allocation8 + $0x48] sm:$0xff]
    %v166 = vld [vmem:[#allocation8 + $0x50] sm:$0xff]
    %v167 = vld [vmem:[#allocation8 + $0x58] sm:$0xff]
    %v168 = vld [vmem:[#allocation8 + $0x60] sm:$0xff]
    %v169 = vld [vmem:[#allocation8 + $0x68] sm:$0xff]
    %v170 = vld [vmem:[#allocation8 + $0x70] sm:$0xff]
    %v171 = vld [vmem:[#allocation8 + $0x78] sm:$0xff]
    %v172 = vld [vmem:[#allocation8 + $0x80] sm:$0xff]
    %v173 = vld [vmem:[#allocation8 + $0x88] sm:$0xff]
    %v174 = vld [vmem:[#allocation8 + $0x90] sm:$0xff]
    %v175 = vld [vmem:[#allocation8 + $0x98] sm:$0xff]
    %v176 = vld [vmem:[#allocation8 + $0xa0] sm:$0xff]
    %v177 = vld [vmem:[#allocation8 + $0xa8] sm:$0xff]
    %v178 = vld [vmem:[#allocation8 + $0xb0] sm:$0xff]
    %v179 = vld [vmem:[#allocation8 + $0xb8] sm:$0xff]
    %v180 = vld [vmem:[#allocation8 + $0xc0] sm:$0xff]
    %v181 = vld [vmem:[#allocation8 + $0xc8] sm:$0xff]
    %v182 = vld [vmem:[#allocation8 + $0xd0] sm:$0xff]
    %v183 = vld [vmem:[#allocation8 + $0xd8] sm:$0xff]
    %v184 = vld [vmem:[#allocation8 + $0xe0] sm:$0xff]
    %v185 = vld [vmem:[#allocation8 + $0xe8] sm:$0xff]
    %v186 = vld [vmem:[#allocation8 + $0xf0] sm:$0xff]
    %v187 = vld [vmem:[#allocation8 + $0xf8] sm:$0xff]
    %v188 = vld [vmem:[%s4] sm:$0x3]
    %v190 = vperm.slane %v188, 0
    %v191 = vperm.slane %v188, 1
    %v226 = vunpack.c.l.b16 %v156
    %v227 = vunpack.c.h.b16 %v156
    %v228 = vunpack.c.l.b16 %v157
    %v229 = vunpack.c.h.b16 %v157
    %v230 = vunpack.c.l.b16 %v158
    %v231 = vunpack.c.h.b16 %v158
    %v232 = vunpack.c.l.b16 %v159
    %v233 = vunpack.c.h.b16 %v159
    %v234 = vunpack.c.l.b16 %v160
    %v235 = vunpack.c.h.b16 %v160
    %v236 = vunpack.c.l.b16 %v161
    %v237 = vunpack.c.h.b16 %v161
    %v238 = vunpack.c.l.b16 %v162
    %v239 = vunpack.c.h.b16 %v162
    %v240 = vunpack.c.l.b16 %v163
    %v241 = vunpack.c.h.b16 %v163
    %v242 = vunpack.c.l.b16 %v164
    %v243 = vunpack.c.h.b16 %v164
    %v244 = vunpack.c.l.b16 %v165
    %v245 = vunpack.c.h.b16 %v165
    %v246 = vunpack.c.l.b16 %v166
    %v247 = vunpack.c.h.b16 %v166
    %v248 = vunpack.c.l.b16 %v167
    %v249 = vunpack.c.h.b16 %v167
    %v250 = vunpack.c.l.b16 %v168
    %v251 = vunpack.c.h.b16 %v168
    %v252 = vunpack.c.l.b16 %v169
    %v253 = vunpack.c.h.b16 %v169
    %v254 = vunpack.c.l.b16 %v170
    %v255 = vunpack.c.h.b16 %v170
    %v256 = vunpack.c.l.b16 %v171
    %v257 = vunpack.c.h.b16 %v171
    %v258 = vunpack.c.l.b16 %v172
    %v259 = vunpack.c.h.b16 %v172
    %v260 = vunpack.c.l.b16 %v173
    %v261 = vunpack.c.h.b16 %v173
    %v262 = vunpack.c.l.b16 %v174
    %v263 = vunpack.c.h.b16 %v174
    %v264 = vunpack.c.l.b16 %v175
    %v265 = vunpack.c.h.b16 %v175
    %v266 = vunpack.c.l.b16 %v176
    %v267 = vunpack.c.h.b16 %v176
    %v268 = vunpack.c.l.b16 %v177
    %v269 = vunpack.c.h.b16 %v177
    %v270 = vunpack.c.l.b16 %v178
    %v271 = vunpack.c.h.b16 %v178
    %v272 = vunpack.c.l.b16 %v179
    %v273 = vunpack.c.h.b16 %v179
    %v274 = vunpack.c.l.b16 %v180
    %v275 = vunpack.c.h.b16 %v180
    %v276 = vunpack.c.l.b16 %v181
    %v277 = vunpack.c.h.b16 %v181
    %v278 = vunpack.c.l.b16 %v182
    %v279 = vunpack.c.h.b16 %v182
    %v280 = vunpack.c.l.b16 %v183
    %v281 = vunpack.c.h.b16 %v183
    %v282 = vunpack.c.l.b16 %v184
    %v283 = vunpack.c.h.b16 %v184
    %v284 = vunpack.c.l.b16 %v185
    %v285 = vunpack.c.h.b16 %v185
    %v286 = vunpack.c.l.b16 %v186
    %v287 = vunpack.c.h.b16 %v186
    %v288 = vunpack.c.l.b16 %v187
    %v289 = vunpack.c.h.b16 %v187
    %v290 = vpack.c.b16 %v228, %v226
    %v291 = vpack.c.b16 %v229, %v227
    %v292 = vpack.c.b16 %v232, %v230
    %v293 = vpack.c.b16 %v233, %v231
    %v294 = vpack.c.b16 %v236, %v234
    %v295 = vpack.c.b16 %v237, %v235
    %v296 = vpack.c.b16 %v240, %v238
    %v297 = vpack.c.b16 %v241, %v239
    %v298 = vpack.c.b16 %v244, %v242
    %v299 = vpack.c.b16 %v245, %v243
    %v300 = vpack.c.b16 %v248, %v246
    %v301 = vpack.c.b16 %v249, %v247
    %v302 = vpack.c.b16 %v252, %v250
    %v303 = vpack.c.b16 %v253, %v251
    %v304 = vpack.c.b16 %v256, %v254
    %v305 = vpack.c.b16 %v257, %v255
    %v306 = vpack.c.b16 %v260, %v258
    %v307 = vpack.c.b16 %v261, %v259
    %v308 = vpack.c.b16 %v264, %v262
    %v309 = vpack.c.b16 %v265, %v263
    %v310 = vpack.c.b16 %v268, %v266
    %v311 = vpack.c.b16 %v269, %v267
    %v312 = vpack.c.b16 %v272, %v270
    %v313 = vpack.c.b16 %v273, %v271
    %v314 = vpack.c.b16 %v276, %v274
    %v315 = vpack.c.b16 %v277, %v275
    %v316 = vpack.c.b16 %v280, %v278
    %v317 = vpack.c.b16 %v281, %v279
    %v318 = vpack.c.b16 %v284, %v282
    %v319 = vpack.c.b16 %v285, %v283
    %v320 = vpack.c.b16 %v288, %v286
    %v321 = vpack.c.b16 %v289, %v287
    %354 = vmatpush.bf16.msra.mxu0 %v304
    %355 = vmatpush.bf16.msra.mxu0 %v302
    %356 = vmatpush.bf16.msra.mxu0 %v300
    %357 = vmatpush.bf16.msra.mxu0 %v298
    %358 = vmatpush.bf16.msra.mxu0 %v296
    %359 = vmatpush.bf16.msra.mxu0 %v294
    %360 = vmatpush.bf16.msra.mxu0 %v292
    %361 = vmatpush.bf16.msra.mxu0 %v290
    %362 = vmatmul.bf16.gmra.mxu0 %v154
    %v363 = vpop.f32.mrf.mxu0
    %v364 = vadd.f32 %v190, %v363
    %v365 = vpop.f32.mrf.mxu0
    %366 = vdwg.mxu0
    %367 = vmatpush.bf16.msra.mxu0 %v320
    %368 = vmatpush.bf16.msra.mxu0 %v318
    %369 = vmatpush.bf16.msra.mxu0 %v316
    %370 = vmatpush.bf16.msra.mxu0 %v314
    %371 = vmatpush.bf16.msra.mxu0 %v312
    %372 = vmatpush.bf16.msra.mxu0 %v310
    %373 = vmatpush.bf16.msra.mxu0 %v308
    %374 = vmatpush.bf16.msra.mxu0 %v306
    %375 = vmatmul.bf16.gmra.mxu0 %v155
    %v376 = vpop.f32.mrf.mxu0
    %v377 = vadd.f32 %v364, %v376
    %v378 = vpop.f32.mrf.mxu0
    %379 = vdwg.mxu0
    %380 = vmatpush.bf16.msra.mxu0 %v305
    %381 = vmatpush.bf16.msra.mxu0 %v303
    %382 = vmatpush.bf16.msra.mxu0 %v301
    %383 = vmatpush.bf16.msra.mxu0 %v299
    %384 = vmatpush.bf16.msra.mxu0 %v297
    %385 = vmatpush.bf16.msra.mxu0 %v295
    %386 = vmatpush.bf16.msra.mxu0 %v293
    %387 = vmatpush.bf16.msra.mxu0 %v291
    %388 = vmatmul.bf16.gmra.mxu0 %v154
    %v389 = vpop.f32.mrf.mxu0
    %v390 = vadd.f32 %v191, %v389
    %v391 = vpop.f32.mrf.mxu0
    %392 = vdwg.mxu0
    %393 = vmatpush.bf16.msra.mxu0 %v321
    %394 = vmatpush.bf16.msra.mxu0 %v319
    %395 = vmatpush.bf16.msra.mxu0 %v317
    %396 = vmatpush.bf16.msra.mxu0 %v315
    %397 = vmatpush.bf16.msra.mxu0 %v313
    %398 = vmatpush.bf16.msra.mxu0 %v311
    %399 = vmatpush.bf16.msra.mxu0 %v309
    %400 = vmatpush.bf16.msra.mxu0 %v307
    %401 = vmatmul.bf16.gmra.mxu0 %v155
    %v402 = vpop.f32.mrf.mxu0
    %v403 = vadd.f32 %v390, %v402
    %v404 = vpop.f32.mrf.mxu0
    %405 = vdwg.mxu0
    %v406 = vmax.f32 %v377, 0.0
    %v407 = vmax.f32 %v403, 0.0
    %v408 = vpack.c.bf16 %v406, %v406
    %v409 = vpack.c.bf16 %v407, %v407
    %v410 = vld [vmem:[#allocation10] sm:$0xf]
    %v411 = vld [vmem:[#allocation10 + $0x4] sm:$0xf]
    %v412 = vld [vmem:[#allocation10 + $0x8] sm:$0xf]
    %v413 = vld [vmem:[#allocation10 + $0xc] sm:$0xf]
    %v414 = vld [vmem:[#allocation10 + $0x10] sm:$0xf]
    %v415 = vld [vmem:[#allocation10 + $0x14] sm:$0xf]
    %v416 = vld [vmem:[#allocation10 + $0x18] sm:$0xf]
    %v417 = vld [vmem:[#allocation10 + $0x1c] sm:$0xf]
    %v418 = vld [vmem:[#allocation10 + $0x20] sm:$0xf]
    %v419 = vld [vmem:[#allocation10 + $0x24] sm:$0xf]
    %v420 = vld [vmem:[#allocation10 + $0x28] sm:$0xf]
    %v421 = vld [vmem:[#allocation10 + $0x2c] sm:$0xf]
    %v422 = vld [vmem:[#allocation10 + $0x30] sm:$0xf]
    %v423 = vld [vmem:[#allocation10 + $0x34] sm:$0xf]
    %v424 = vld [vmem:[#allocation10 + $0x38] sm:$0xf]
    %v425 = vld [vmem:[#allocation10 + $0x3c] sm:$0xf]
    %v426 = vld [vmem:[#allocation10 + $0x40] sm:$0xf]
    %v427 = vld [vmem:[#allocation10 + $0x44] sm:$0xf]
    %v428 = vld [vmem:[#allocation10 + $0x48] sm:$0xf]
    %v429 = vld [vmem:[#allocation10 + $0x4c] sm:$0xf]
    %v430 = vld [vmem:[#allocation10 + $0x50] sm:$0xf]
    %v431 = vld [vmem:[#allocation10 + $0x54] sm:$0xf]
    %v432 = vld [vmem:[#allocation10 + $0x58] sm:$0xf]
    %v433 = vld [vmem:[#allocation10 + $0x5c] sm:$0xf]
    %v434 = vld [vmem:[#allocation10 + $0x60] sm:$0xf]
    %v435 = vld [vmem:[#allocation10 + $0x64] sm:$0xf]
    %v436 = vld [vmem:[#allocation10 + $0x68] sm:$0xf]
    %v437 = vld [vmem:[#allocation10 + $0x6c] sm:$0xf]
    %v438 = vld [vmem:[#allocation10 + $0x70] sm:$0xf]
    %v439 = vld [vmem:[#allocation10 + $0x74] sm:$0xf]
    %v440 = vld [vmem:[#allocation10 + $0x78] sm:$0xf]
    %v441 = vld [vmem:[#allocation10 + $0x7c] sm:$0xf]
    %v442 = vld [vmem:[%s6] sm:$0x1]
    %v444 = vperm.slane %v442, 0
    %v478 = vunpack.c.l.b16 %v410
    %v479 = vunpack.c.l.b16 %v411
    %v480 = vunpack.c.l.b16 %v412
    %v481 = vunpack.c.l.b16 %v413
    %v482 = vunpack.c.l.b16 %v414
    %v483 = vunpack.c.l.b16 %v415
    %v484 = vunpack.c.l.b16 %v416
    %v485 = vunpack.c.l.b16 %v417
    %v486 = vunpack.c.l.b16 %v418
    %v487 = vunpack.c.l.b16 %v419
    %v488 = vunpack.c.l.b16 %v420
    %v489 = vunpack.c.l.b16 %v421
    %v490 = vunpack.c.l.b16 %v422
    %v491 = vunpack.c.l.b16 %v423
    %v492 = vunpack.c.l.b16 %v424
    %v493 = vunpack.c.l.b16 %v425
    %v494 = vunpack.c.l.b16 %v426
    %v495 = vunpack.c.l.b16 %v427
    %v496 = vunpack.c.l.b16 %v428
    %v497 = vunpack.c.l.b16 %v429
    %v498 = vunpack.c.l.b16 %v430
    %v499 = vunpack.c.l.b16 %v431
    %v500 = vunpack.c.l.b16 %v432
    %v501 = vunpack.c.l.b16 %v433
    %v502 = vunpack.c.l.b16 %v434
    %v503 = vunpack.c.l.b16 %v435
    %v504 = vunpack.c.l.b16 %v436
    %v505 = vunpack.c.l.b16 %v437
    %v506 = vunpack.c.l.b16 %v438
    %v507 = vunpack.c.l.b16 %v439
    %v508 = vunpack.c.l.b16 %v440
    %v509 = vunpack.c.l.b16 %v441
    %v510 = vpack.c.b16 %v479, %v478
    %v511 = vpack.c.b16 %v481, %v480
    %v512 = vpack.c.b16 %v483, %v482
    %v513 = vpack.c.b16 %v485, %v484
    %v514 = vpack.c.b16 %v487, %v486
    %v515 = vpack.c.b16 %v489, %v488
    %v516 = vpack.c.b16 %v491, %v490
    %v517 = vpack.c.b16 %v493, %v492
    %v518 = vpack.c.b16 %v495, %v494
    %v519 = vpack.c.b16 %v497, %v496
    %v520 = vpack.c.b16 %v499, %v498
    %v521 = vpack.c.b16 %v501, %v500
    %v522 = vpack.c.b16 %v503, %v502
    %v523 = vpack.c.b16 %v505, %v504
    %v524 = vpack.c.b16 %v507, %v506
    %v525 = vpack.c.b16 %v509, %v508
    %542 = vmatpush.bf16.msra.mxu0 %v517
    %543 = vmatpush.bf16.msra.mxu0 %v516
    %544 = vmatpush.bf16.msra.mxu0 %v515
    %545 = vmatpush.bf16.msra.mxu0 %v514
    %546 = vmatpush.bf16.msra.mxu0 %v513
    %547 = vmatpush.bf16.msra.mxu0 %v512
    %548 = vmatpush.bf16.msra.mxu0 %v511
    %549 = vmatpush.bf16.msra.mxu0 %v510
    %550 = vmatmul.bf16.gmra.mxu0 %v408
    %v551 = vpop.f32.mrf.mxu0
    %v552 = vadd.f32 %v444, %v551
    %v553 = vpop.f32.mrf.mxu0
    %554 = vdwg.mxu0
    %555 = vmatpush.bf16.msra.mxu0 %v525
    %556 = vmatpush.bf16.msra.mxu0 %v524
    %557 = vmatpush.bf16.msra.mxu0 %v523
    %558 = vmatpush.bf16.msra.mxu0 %v522
    %559 = vmatpush.bf16.msra.mxu0 %v521
    %560 = vmatpush.bf16.msra.mxu0 %v520
    %561 = vmatpush.bf16.msra.mxu0 %v519
    %562 = vmatpush.bf16.msra.mxu0 %v518
    %563 = vmatmul.bf16.gmra.mxu0 %v409
    %v564 = vpop.f32.mrf.mxu0
    %v565 = vadd.f32 %v552, %v564
    %v566 = vpop.f32.mrf.mxu0
    %567 = vdwg.mxu0
    %v568 = vmax.f32 %v565, 0.0
    %v569 = vand.u32 2147483647, %v565
    %v570 = vsub.f32 0.0, %v569
    %v571 = vmul.f32 %v570, 1.442695
    %v572 = vpow.pop %v571
    %v573 = vadd.f32 %v572, 1.0
    %v574 = vlog2.pop %v573
    %v575 = vmul.f32 %v574, 0.6931472
    %v576 = vadd.f32 %v568, %v575
    %v577 = vadd.f32 %v576, 1.0
    %v578 = vlaneseq
    %v579 = vand.u32 %v578, 127
    %vm580 = vcmp.eq.s32.totalorder %v579, 4
    %v581 = vsel %vm580, %v565, %v577
    %582 = vst [vmem:[#allocation11] sm:$0xff] %v581
    // Predicated region
    $region50: #{tpu_custom_call.1} parent=1 // pred_check
      _
    $region51: #{tpu_custom_call.1} parent=1 // pred_check_branch
      %584 = sbr.rel (0) target = $region53
    $region52: #{tpu_custom_call.1} parent=1 // pred_region
      %586 = vsyncadd [#allocation4], 0
      %s588 = sshll.u32 [#allocation11], 4
      %s589 = int_to_ptr.vmem [resolvable:$true] %s588
      %s590 = sshll.u32 %s7, 4
      %s591 = int_to_ptr.hbm [resolvable:$true] %s590
      %593 = dma.vmem_to_hbm [thread:$0]  %s589, 128, %s591, [#allocation4]
    $region53: #{tpu_custom_call.1} parent=1 // pred_fallthru
      _
    // Predicated region
    $region54: #{tpu_custom_call.1} parent=1 // pred_check
      _
    $region55: #{tpu_custom_call.1} parent=1 // pred_check_branch
      %595 = sbr.rel (0) target = $region57
    $region56: #{tpu_custom_call.1} parent=1 // pred_region
      %597 = dma.done [#allocation4], 128
    $region57: #{tpu_custom_call.1} parent=1 // pred_fallthru
      _
    %598 = vsyncpa [#allocation3], 1
    %599 = vsyncpa [#allocation6], 1
    %600 = vsyncpa [#allocation9], 1
    %601 = vsyncpa [#allocation4], 1

</llo_original>
